<compile_context>
chip_gen: v7x
topology: tpu7x:2x2x1
jax: 0.10.0
libtpu: 0.0.40
codegen_flags: <defaults>
</compile_context>

<pallas_src>
import functools

import numpy as np
import jax
import jax.numpy as jnp
from jax.experimental import pallas as pl
from jax.experimental.pallas import tpu as pltpu


# ------------------------------ kernels ------------------------------------ #

def _proj_scores_kernel(feat_ref, w_ref, wlr_ref, h_ref, scores_ref):
    """h = feat_block @ W ; scores = h @ [wl | wr] (one MXU pass for both)."""
    h = jnp.dot(feat_ref[...], w_ref[...], preferred_element_type=jnp.float32)
    h_ref[...] = h
    scores_ref[...] = jnp.dot(h, wlr_ref[...],
                              preferred_element_type=jnp.float32)


def _gat_aggregate_kernel(adj_ref, arow_ref, acolT_ref, h_ref, out_ref,
                          *, num_heads, out_feats, negative_slope):
    """Masked edge-softmax + aggregation for one row tile (TM rows)."""
    mask = adj_ref[...] > 0                                  # (TM, N), adj is bf16
    neg = jnp.float32(negative_slope)
    outs = []
    for k in range(num_heads):                               # small static loop
        # arow tile is (TM, H) -> (TM, 1) column; acol is head-major (H, N) -> (1, N) row
        e = arow_ref[:, k:k + 1] + acolT_ref[k:k + 1, :]     # (TM, N)
        e = jnp.where(e >= 0, e, neg * e)                    # LeakyReLU
        e = jnp.where(mask, e, jnp.float32(-1e30))           # mask non-edges
        m = jnp.max(e, axis=-1, keepdims=True)               # (TM, 1)
        p = jnp.exp(e - m)                                   # masked entries -> 0
        denom = jnp.sum(p, axis=-1, keepdims=True)           # (TM, 1)
        num = jnp.dot(p, h_ref[:, k * out_feats:(k + 1) * out_feats],
                      preferred_element_type=jnp.float32)    # (TM, Fo) on MXU
        # rows with no edge at all produce exactly zero (keeps isolated-node semantics)
        valid = (m > jnp.float32(-1e29)).astype(jnp.float32)
        inv = pl.reciprocal(denom, approx=True) * valid      # EUP, no N^2 divide
        outs.append(num * inv)
    out_ref[...] = jnp.concatenate(outs, axis=-1)            # lane-dense (TM, H*Fo)


# ------------------------------ wrapper ------------------------------------ #

def _pick_block_rows(n, adj_itemsize, requested=None):
    """Largest row tile that divides N and keeps the adjacency tile within a
    generation-aware VMEM budget (smaller on v7x's 64 MiB VMEM)."""
    if requested is not None:
        if n % requested != 0:
            raise ValueError("block_rows must divide N")
        return requested
    try:
        info = pltpu.get_tpu_info()
        vmem_cap = int(getattr(info, "vmem_capacity_bytes", 64 * 2**20))
    except Exception:
        vmem_cap = 64 * 2**20
    budget = max(vmem_cap // 16, 1 * 2**20)   # leave room for dbl-buffer + f32 temps
    for cand in (512, 256, 128, 64, 32, 16):
        if cand <= n and n % cand == 0 and cand * n * adj_itemsize <= budget:
            return cand
    return n


def gat_conv_forward(row_ptr, col_ind, col_ptr, row_ind, feat, params,
                     negative_slope=0.2, block_rows=None):
    # col_ptr / row_ind (CSC) are only needed for the backward pass in dgNN.
    del col_ptr, row_ind
    W = params["W"]                       # (in_feats, H*Fo)
    attn_l = params["attn_l"]             # (1, H, Fo)
    attn_r = params["attn_r"]             # (1, H, Fo)

    N, in_feats = feat.shape
    _, num_heads, out_feats = attn_l.shape
    HF = num_heads * out_feats
    H2 = 2 * num_heads

    # --- glue: single block-diagonal score matrix [wl | wr] of shape (HF, 2H) ---
    wlr_np = np.zeros((HF, H2), np.float32)
    al = np.asarray(attn_l, np.float32).reshape(num_heads, out_feats)
    ar = np.asarray(attn_r, np.float32).reshape(num_heads, out_feats)
    for k in range(num_heads):
        wlr_np[k * out_feats:(k + 1) * out_feats, k] = al[k]
        wlr_np[k * out_feats:(k + 1) * out_feats, num_heads + k] = ar[k]
    wlr = jnp.asarray(wlr_np)

    # --- glue: dense adjacency mask from the CSR structure (bf16 halves traffic) ---
    rp = np.asarray(row_ptr)
    ci = np.asarray(col_ind)
    deg = np.diff(rp)
    rows = np.repeat(np.arange(N), deg)
    adj_np = np.zeros((N, N), np.float32)
    adj_np[rows, ci] = 1.0
    adj = jnp.asarray(adj_np, dtype=jnp.bfloat16)
    adj_itemsize = 2

    tm = _pick_block_rows(N, adj_itemsize, block_rows)
    grid = (N // tm,)

    # --- kernel 1: projection + attention scores (row-tiled) ---
    h, scores = pl.pallas_call(
        _proj_scores_kernel,
        out_shape=(jax.ShapeDtypeStruct((N, HF), jnp.float32),
                   jax.ShapeDtypeStruct((N, H2), jnp.float32)),
        grid=grid,
        in_specs=[pl.BlockSpec((tm, in_feats), lambda i: (i, 0)),
                  pl.BlockSpec((in_feats, HF), lambda i: (0, 0)),
                  pl.BlockSpec((HF, H2), lambda i: (0, 0))],
        out_specs=(pl.BlockSpec((tm, HF), lambda i: (i, 0)),
                   pl.BlockSpec((tm, H2), lambda i: (i, 0))),
        compiler_params=pltpu.CompilerParams(
            dimension_semantics=("parallel",)),
    )(feat, W, wlr)

    attn_row = scores[:, :num_heads]              # (N, H)  row-tiled in kernel 2
    attn_colT = scores[:, num_heads:].T           # (H, N)  head-major, full-resident

    # --- VMEM budget + advisory cost model for the aggregation call ---
    est = (2 * tm * N * adj_itemsize              # adjacency tile, double-buffered
           + 6 * tm * N * 4                       # e / p f32 temporaries
           + 2 * N * HF * 4                       # h (full, resident)
           + 2 * num_heads * N * 4                # attn_col
           + 4 * tm * (HF + num_heads) * 4)       # out + attn_row buffers
    vmem_limit = int(min(max(2 * est, 32 * 2**20), 96 * 2**20))
    cost = pl.CostEstimate(
        flops=int(2 * num_heads * N * N * out_feats + 8 * num_heads * N * N),
        transcendentals=int(num_heads * N * N + num_heads * N),
        bytes_accessed=int(N * N * adj_itemsize
                           + (N // tm) * (N * HF + num_heads * N) * 4
                           + N * (HF + num_heads) * 4),
    )

    # --- kernel 2: masked edge softmax + aggregation (row-tiled) ---
    agg = functools.partial(_gat_aggregate_kernel,
                            num_heads=num_heads,
                            out_feats=out_feats,
                            negative_slope=negative_slope)
    out_flat = pl.pallas_call(
        agg,
        out_shape=jax.ShapeDtypeStruct((N, HF), jnp.float32),
        grid=grid,
        in_specs=[pl.BlockSpec((tm, N), lambda i: (i, 0)),          # adjacency tile
                  pl.BlockSpec((tm, num_heads), lambda i: (i, 0)),  # attn_row tile
                  pl.BlockSpec((num_heads, N), lambda i: (0, 0)),   # attn_col (H, N)
                  pl.BlockSpec((N, HF), lambda i: (0, 0))],         # h (full)
        out_specs=pl.BlockSpec((tm, HF), lambda i: (i, 0)),         # lane-dense out
        compiler_params=pltpu.CompilerParams(
            dimension_semantics=("parallel",),
            vmem_limit_bytes=vmem_limit),
        cost_estimate=cost,
    )(adj, attn_row, attn_colT, h)

    return out_flat.reshape(N, num_heads, out_feats)       # free, layout-preserving


# ------------------------------ reference ----------------------------------- #

def _reference_numpy(row_ptr, col_ind, feat, W, attn_l, attn_r, negative_slope):
    N = feat.shape[0]
    _, H, Fo = attn_l.shape
    h = feat @ W
    h3 = h.reshape(N, H, Fo)
    arow = (attn_l * h3).sum(-1)      # (N, H)
    acol = (attn_r * h3).sum(-1)      # (N, H)
    out = np.zeros((N, H, Fo), np.float32)
    for i in range(N):
        nbrs = col_ind[row_ptr[i]:row_ptr[i + 1]]
        if len(nbrs) == 0:
            continue
        for k in range(H):
            e = arow[i, k] + acol[nbrs, k]
            e = np.where(e >= 0, e, negative_slope * e)
            e = e - e.max()
            p = np.exp(e)
            p = p / p.sum()
            out[i, k] = p @ h3[nbrs, k, :]
    return out


# ------------------------------ main ---------------------------------------- #

if __name__ == "__main__":
    N = 256           # number of nodes
    in_feats = 32
    out_feats = 16
    num_heads = 4
    negative_slope = 0.2

    key = jax.random.PRNGKey(0)
    k_feat, k_w, k_l, k_r, k_adj = jax.random.split(key, 5)

    # --- deterministic parameter init (xavier_normal_, gain = sqrt(2)) ---
    gain = float(np.sqrt(2.0))
    std_w = gain * np.sqrt(2.0 / (in_feats + out_feats * num_heads))
    W = (jax.random.normal(k_w, (in_feats, out_feats * num_heads),
                           jnp.float32) * std_w)
    std_a = gain * np.sqrt(2.0 / (num_heads * out_feats + out_feats))
    attn_l = jax.random.normal(k_l, (1, num_heads, out_feats),
                               jnp.float32) * std_a
    attn_r = jax.random.normal(k_r, (1, num_heads, out_feats),
                               jnp.float32) * std_a
    params = {"W": W, "attn_l": attn_l, "attn_r": attn_r}

    # --- node features ---
    feat = jax.random.normal(k_feat, (N, in_feats), jnp.float32)

    # --- deterministic random graph (with self loops), CSR + CSC ---
    dense = np.array(jax.random.uniform(k_adj, (N, N)) < 0.05)   # writable copy
    np.fill_diagonal(dense, True)
    col_ind = np.concatenate([np.nonzero(dense[i])[0]
                              for i in range(N)]).astype(np.int32)
    deg = dense.sum(axis=1)
    row_ptr = np.concatenate([[0], np.cumsum(deg)]).astype(np.int32)
    row_ind = np.concatenate([np.nonzero(dense[:, j])[0]
                              for j in range(N)]).astype(np.int32)
    col_deg = dense.sum(axis=0)
    col_ptr = np.concatenate([[0], np.cumsum(col_deg)]).astype(np.int32)

    # --- run Pallas kernels (block_rows=64 -> grid of 4 row tiles) ---
    out = gat_conv_forward(row_ptr, col_ind, col_ptr, row_ind, feat, params,
                           negative_slope=negative_slope, block_rows=64)
    out = jax.block_until_ready(out)

    # --- check against a pure numpy reference of the fused GAT forward ---
    ref = _reference_numpy(row_ptr, col_ind,
                           np.asarray(feat), np.asarray(W),
                           np.asarray(attn_l), np.asarray(attn_r),
                           negative_slope)
    np.testing.assert_allclose(np.asarray(out), ref, rtol=3e-3, atol=3e-3)

    print("KERNEL_OK")
</pallas_src>

<mosaic_0001>
module attributes {stable_mosaic.version = 11 : i64} {
  func.func @_proj_scores_kernel(%arg0: i32, %arg1: memref<64x32xf32, #tpu.memory_space<vmem>>, %arg2: memref<32x64xf32, #tpu.memory_space<vmem>>, %arg3: memref<64x8xf32, #tpu.memory_space<vmem>>, %arg4: memref<64x64xf32, #tpu.memory_space<vmem>>, %arg5: memref<64x8xf32, #tpu.memory_space<vmem>>) attributes {dimension_semantics = [#tpu.dimension_semantics<parallel>], iteration_bounds = array<i64: 4>, scalar_prefetch = 0 : i64, scratch_operands = 0 : i64, tpu.core_type = #tpu.core_type<tc>, window_params = [{transform_indices = @transform_0, window_bounds = array<i64: 64, 32>}, {pipeline_mode = #tpu.pipeline_mode<synchronous>, transform_indices = @transform_1, window_bounds = array<i64: 32, 64>}, {pipeline_mode = #tpu.pipeline_mode<synchronous>, transform_indices = @transform_2, window_bounds = array<i64: 64, 8>}, {transform_indices = @transform_3, window_bounds = array<i64: 64, 64>}, {transform_indices = @transform_4, window_bounds = array<i64: 64, 8>}]} {
    %c0 = arith.constant 0 : index
    %c0_0 = arith.constant 0 : index
    %0 = vector.load %arg1[%c0, %c0_0] : memref<64x32xf32, #tpu.memory_space<vmem>>, vector<64x32xf32>
    %c0_1 = arith.constant 0 : index
    %c0_2 = arith.constant 0 : index
    %1 = vector.load %arg2[%c0_1, %c0_2] : memref<32x64xf32, #tpu.memory_space<vmem>>, vector<32x64xf32>
    %cst = arith.constant dense<0.000000e+00> : vector<64x64xf32>
    %2 = tpu.matmul %0, %1, %cst {dimension_numbers = #tpu.dot_dimension_numbers<[1], [0], [0], [1], [0, 0, 1, 1], [], []>} : vector<64x32xf32>, vector<32x64xf32>, vector<64x64xf32> -> vector<64x64xf32>
    %c0_3 = arith.constant 0 : index
    %c0_4 = arith.constant 0 : index
    %3 = vector.load %arg4[%c0_3, %c0_4] : memref<64x64xf32, #tpu.memory_space<vmem>>, vector<64x64xf32>
    tpu.vector_store %arg4[%c0_3, %c0_4], %2 {strides = array<i32>} : memref<64x64xf32, #tpu.memory_space<vmem>>, vector<64x64xf32>,
    %c0_5 = arith.constant 0 : index
    %c0_6 = arith.constant 0 : index
    %4 = vector.load %arg3[%c0_5, %c0_6] : memref<64x8xf32, #tpu.memory_space<vmem>>, vector<64x8xf32>
    %cst_7 = arith.constant dense<0.000000e+00> : vector<64x8xf32>
    %5 = tpu.matmul %2, %4, %cst_7 {dimension_numbers = #tpu.dot_dimension_numbers<[1], [0], [0], [1], [0, 0, 1, 1], [], []>} : vector<64x64xf32>, vector<64x8xf32>, vector<64x8xf32> -> vector<64x8xf32>
    %c0_8 = arith.constant 0 : index
    %c0_9 = arith.constant 0 : index
    %6 = vector.load %arg5[%c0_8, %c0_9] : memref<64x8xf32, #tpu.memory_space<vmem>>, vector<64x8xf32>
    tpu.vector_store %arg5[%c0_8, %c0_9], %5 {strides = array<i32>} : memref<64x8xf32, #tpu.memory_space<vmem>>, vector<64x8xf32>,
    return
  }
  func.func @transform_0(%arg0: i32) -> (i32, i32) {
    %c0_i32 = arith.constant 0 : i32
    %c0_i32_0 = arith.constant 0 : i32
    return %arg0, %c0_i32 : i32, i32
  }
  func.func @transform_1(%arg0: i32) -> (i32, i32) {
    %c0_i32 = arith.constant 0 : i32
    %c0_i32_0 = arith.constant 0 : i32
    %c0_i32_1 = arith.constant 0 : i32
    return %c0_i32, %c0_i32_0 : i32, i32
  }
  func.func @transform_2(%arg0: i32) -> (i32, i32) {
    %c0_i32 = arith.constant 0 : i32
    %c0_i32_0 = arith.constant 0 : i32
    %c0_i32_1 = arith.constant 0 : i32
    return %c0_i32, %c0_i32_0 : i32, i32
  }
  func.func @transform_3(%arg0: i32) -> (i32, i32) {
    %c0_i32 = arith.constant 0 : i32
    %c0_i32_0 = arith.constant 0 : i32
    return %arg0, %c0_i32 : i32, i32
  }
  func.func @transform_4(%arg0: i32) -> (i32, i32) {
    %c0_i32 = arith.constant 0 : i32
    %c0_i32_0 = arith.constant 0 : i32
    return %arg0, %c0_i32 : i32, i32
  }
}

</mosaic_0001>

<llo_original>
// kernel: tpu_custom_call.1
$region0: #{tpu_custom_call.1}
  #allocation0 [shape = 'u32[]', space=smem, size = 0x4, offset = 0x4, fixed_abs, tag = 'smem constant byte address 0x4 - core index']
  #allocation1 [shape = 'u32[144,128]{1,0:T(1,128)}', space=vmem, size = 0x12000, scoped, tag = 'internal scratch']
  %s0 = inlined_call_operand.vmem [shape: f32[256,32], index: 0, kind: input, shape index: {}]
  %s1 = inlined_call_operand.vmem [shape: f32[32,64], index: 1, kind: input, shape index: {}]
  %s2 = inlined_call_operand.vmem [shape: f32[64,8], index: 2, kind: input, shape index: {}]
  %s3 = inlined_call_operand.vmem [shape: f32[256,64], index: 3, kind: output, shape index: {0}]
  %s4 = inlined_call_operand.vmem [shape: f32[256,8], index: 4, kind: output, shape index: {1}]
  %5 = xla_tuple %s3, %s4
  %s6 = sld [smem:[#allocation0]]
  $region53: #{tpu_custom_call.1} parent=0
    _
  %s8 = ssub.s32 1, %s6
  %s9 = scalar_select 0, %s8, %s6
  loop: start=0, step=1, limit=6
  $region2: #{tpu_custom_call.1} parent=0 // loop_pre_header
    _
  $region3: #{tpu_custom_call.1} parent=0 // loop_header
    %s11 = sphi 0, %s15
    %p12 = scmp.ge.s32.totalorder %s11, 6
    %s21 = sphi 0, %s23
    %s24 = sphi 0, %s21
    %s25 = sphi 0, %s24
    %s41 = sphi 0, %s25
    %s45 = sphi 0, %s45
    %s47 = sphi 0, %s45
    %s48 = sphi 0, %s47
    %s62 = sphi 0, %s48
    %s66 = sphi 0, %s66
    %s68 = sphi 0, %s66
    %s69 = sphi 0, %s68
    %s83 = sphi 0, %s69
    %s89 = sphi 0, %s91
    %s92 = sphi 0, %s89
    %s93 = sphi 0, %s92
    %s109 = sphi 0, %s93
    %s115 = sphi 0, %s117
    %s118 = sphi 0, %s115
    %s119 = sphi 0, %s118
    %s135 = sphi 0, %s119
  $region4: #{tpu_custom_call.1} parent=0 // loop_header_branch
    %14 = sbr.rel (%p12) target = $region8
  $region5: #{tpu_custom_call.1} parent=0 // loop_body
    %s16 = ssub.s32 %s11, 1
    %s17 = ssub.s32 %s11, 2
    %s18 = sadd.s32 %s11, 1
    %s19 = ssub.s32 %s11, %s18
    %p20 = scmp.eq.s32.totalorder %s19, 0
    %s22 = sadd.s32 %s21, 1
    %s23 = scalar_select %p20, %s21, %s22
    %p26 = pneg %p20
    %p27 = scmp.eq.s32.totalorder %s11, 3
    %p28 = por %p26, %p27
    %p29 = scmp.ne.s32.totalorder %s21, %s24
    %p30 = scmp.eq.s32.totalorder %s11, 0
    %p31 = por %p29, %p30
    %p32 = scmp.ne.s32.totalorder %s21, %s24
    %p33 = scmp.eq.s32.totalorder %s16, 3
    %p34 = por %p32, %p33
    %p35 = scmp.ne.s32.totalorder %s24, %s25
    %p36 = scmp.eq.s32.totalorder %s16, 0
    %p37 = por %p35, %p36
    %p38 = scmp.ne.s32.totalorder %s24, %s25
    %p39 = scmp.eq.s32.totalorder %s17, 3
    %p40 = por %p38, %p39
    %p42 = scmp.ne.s32.totalorder %s25, %s41
    %p43 = scmp.eq.s32.totalorder %s17, 0
    %p44 = por %p42, %p43
    %s46 = sadd.s32 %s45, 1
    %p49 = scmp.eq.s32.totalorder %s11, 3
    %p50 = scmp.ne.s32.totalorder %s45, %s47
    %p51 = scmp.eq.s32.totalorder %s11, 0
    %p52 = por %p50, %p51
    %p53 = scmp.ne.s32.totalorder %s45, %s47
    %p54 = scmp.eq.s32.totalorder %s16, 3
    %p55 = por %p53, %p54
    %p56 = scmp.ne.s32.totalorder %s47, %s48
    %p57 = scmp.eq.s32.totalorder %s16, 0
    %p58 = por %p56, %p57
    %p59 = scmp.ne.s32.totalorder %s47, %s48
    %p60 = scmp.eq.s32.totalorder %s17, 3
    %p61 = por %p59, %p60
    %p63 = scmp.ne.s32.totalorder %s48, %s62
    %p64 = scmp.eq.s32.totalorder %s17, 0
    %p65 = por %p63, %p64
    %s67 = sadd.s32 %s66, 1
    %p70 = scmp.eq.s32.totalorder %s11, 3
    %p71 = scmp.ne.s32.totalorder %s66, %s68
    %p72 = scmp.eq.s32.totalorder %s11, 0
    %p73 = por %p71, %p72
    %p74 = scmp.ne.s32.totalorder %s66, %s68
    %p75 = scmp.eq.s32.totalorder %s16, 3
    %p76 = por %p74, %p75
    %p77 = scmp.ne.s32.totalorder %s68, %s69
    %p78 = scmp.eq.s32.totalorder %s16, 0
    %p79 = por %p77, %p78
    %p80 = scmp.ne.s32.totalorder %s68, %s69
    %p81 = scmp.eq.s32.totalorder %s17, 3
    %p82 = por %p80, %p81
    %p84 = scmp.ne.s32.totalorder %s69, %s83
    %p85 = scmp.eq.s32.totalorder %s17, 0
    %p86 = por %p84, %p85
    %s87 = ssub.s32 %s11, %s18
    %p88 = scmp.eq.s32.totalorder %s87, 0
    %s90 = sadd.s32 %s89, 1
    %s91 = scalar_select %p88, %s89, %s90
    %p94 = pneg %p88
    %p95 = scmp.eq.s32.totalorder %s11, 3
    %p96 = por %p94, %p95
    %p97 = scmp.ne.s32.totalorder %s89, %s92
    %p98 = scmp.eq.s32.totalorder %s11, 0
    %p99 = por %p97, %p98
    %p100 = scmp.ne.s32.totalorder %s89, %s92
    %p101 = scmp.eq.s32.totalorder %s16, 3
    %p102 = por %p100, %p101
    %p103 = scmp.ne.s32.totalorder %s92, %s93
    %p104 = scmp.eq.s32.totalorder %s16, 0
    %p105 = por %p103, %p104
    %p106 = scmp.ne.s32.totalorder %s92, %s93
    %p107 = scmp.eq.s32.totalorder %s17, 3
    %p108 = por %p106, %p107
    %p110 = scmp.ne.s32.totalorder %s93, %s109
    %p111 = scmp.eq.s32.totalorder %s17, 0
    %p112 = por %p110, %p111
    %s113 = ssub.s32 %s11, %s18
    %p114 = scmp.eq.s32.totalorder %s113, 0
    %s116 = sadd.s32 %s115, 1
    %s117 = scalar_select %p114, %s115, %s116
    %p120 = pneg %p114
    %p121 = scmp.eq.s32.totalorder %s11, 3
    %p122 = por %p120, %p121
    %p123 = scmp.ne.s32.totalorder %s115, %s118
    %p124 = scmp.eq.s32.totalorder %s11, 0
    %p125 = por %p123, %p124
    %p126 = scmp.ne.s32.totalorder %s115, %s118
    %p127 = scmp.eq.s32.totalorder %s16, 3
    %p128 = por %p126, %p127
    %p129 = scmp.ne.s32.totalorder %s118, %s119
    %p130 = scmp.eq.s32.totalorder %s16, 0
    %p131 = por %p129, %p130
    %p132 = scmp.ne.s32.totalorder %s118, %s119
    %p133 = scmp.eq.s32.totalorder %s17, 3
    %p134 = por %p132, %p133
    %p136 = scmp.ne.s32.totalorder %s119, %s135
    %p137 = scmp.eq.s32.totalorder %s17, 0
    %p138 = por %p136, %p137
    %p139 = scmp.le.s32.totalorder 1, %s11
    %p140 = scmp.lt.s32.totalorder %s11, 5
    %p141 = pnand %p139, %p140
    %p142 = pneg %p141
    // Predicated region
    $region9: #{tpu_custom_call.1} parent=5 // pred_check
      _
    $region10: #{tpu_custom_call.1} parent=5 // pred_check_branch
      %144 = sbr.rel (%p141) target = $region12
    $region11: #{tpu_custom_call.1} parent=5 // pred_region
      %s145 = ssub.s32 %s11, 1
      // Predicated region
      $region13: #{tpu_custom_call.1} parent=11 // pred_check
        %p146 = pneg %p58
      $region14: #{tpu_custom_call.1} parent=11 // pred_check_branch
        %148 = sbr.rel (%p146) target = $region16
      $region15: #{tpu_custom_call.1} parent=11 // pred_region
        _
      $region16: #{tpu_custom_call.1} parent=11 // pred_fallthru
        _
      // Predicated region
      $region17: #{tpu_custom_call.1} parent=11 // pred_check
        %p149 = pneg %p79
      $region18: #{tpu_custom_call.1} parent=11 // pred_check_branch
        %151 = sbr.rel (%p149) target = $region20
      $region19: #{tpu_custom_call.1} parent=11 // pred_region
        _
      $region20: #{tpu_custom_call.1} parent=11 // pred_fallthru
        _
    $region12: #{tpu_custom_call.1} parent=5 // pred_fallthru
      _
    %p152 = scmp.lt.s32.totalorder %s11, 4
    // Predicated region
    $region21: #{tpu_custom_call.1} parent=5 // pred_check
      %p153 = pneg %p152
    $region22: #{tpu_custom_call.1} parent=5 // pred_check_branch
      %155 = sbr.rel (%p153) target = $region24
    $region23: #{tpu_custom_call.1} parent=5 // pred_region
      // Predicated region
      $region25: #{tpu_custom_call.1} parent=23 // pred_check
        %p156 = pneg %p31
      $region26: #{tpu_custom_call.1} parent=23 // pred_check_branch
        %158 = sbr.rel (%p156) target = $region28
      $region27: #{tpu_custom_call.1} parent=23 // pred_region
        %s159 = smul.u32 8, %s11
        %p160 = scmp.lt.s32.totalorder %s159, 31
        %s161 = scalar_select %p160, %s159, 31
        %s162 = smul.addr %s161, 8
        %s163 = scalar_lea.vmem %s0, %s162
        %s164 = smul.u32 8, %s11
      $region28: #{tpu_custom_call.1} parent=23 // pred_fallthru
        _
    $region24: #{tpu_custom_call.1} parent=5 // pred_fallthru
      _
    %p165 = scmp.le.s32.totalorder 1, %s11
    %p166 = scmp.lt.s32.totalorder %s11, 5
    %p167 = pnand %p165, %p166
    %p168 = pneg %p167
    // Predicated region
    $region29: #{tpu_custom_call.1} parent=5 // pred_check
      _
    $region30: #{tpu_custom_call.1} parent=5 // pred_check_branch
      %170 = sbr.rel (%p167) target = $region32
    $region31: #{tpu_custom_call.1} parent=5 // pred_region
      %s171 = ssub.s32 %s11, 1
      %s172 = smul.u32 8, %s16
      %p173 = scmp.lt.s32.totalorder %s172, 31
      %s174 = scalar_select %p173, %s172, 31
      %s175 = smul.addr %s174, 8
      %s176 = scalar_lea.vmem %s0, %s175
      %p177 = pneg %p37
      %p178 = pneg %p34
      %p179 = pneg %p58
      %p180 = pneg %p55
      %p181 = pneg %p79
      %p182 = pneg %p76
      %p183 = pneg %p105
      %p184 = pneg %p102
      %s185 = smul.u32 8, %s16
      %p186 = scmp.lt.s32.totalorder %s185, 31
      %s187 = scalar_select %p186, %s185, 31
      %s188 = smul.addr %s187, 8
      %s189 = scalar_lea.vmem %s3, %s188
      %p190 = pneg %p131
      %p191 = pneg %p128
      %s192 = smul.u32 8, %s16
      %p193 = scmp.lt.s32.totalorder %s192, 31
      %s194 = scalar_select %p193, %s192, 31
      %s195 = smul.addr %s194, 8
      %s196 = scalar_lea.vmem %s4, %s195
      %s197 = smul.u32 8, %s16
      %p198 = scmp.lt.s32.totalorder %s197, 31
      %s199 = scalar_select %p198, %s197, 31
      %s200 = smul.addr %s199, 8
      %s201 = scalar_lea.vmem %s0, %s200
      %s202 = smul.u32 8, %s16
      %s203 = smul.u32 8, %s16
      %p204 = scmp.lt.s32.totalorder %s203, 31
      %s205 = scalar_select %p204, %s203, 31
      %s206 = smul.addr %s205, 8
      %s207 = scalar_lea.vmem %s3, %s206
      %s208 = smul.u32 8, %s16
      %s209 = smul.u32 8, %s16
      %p210 = scmp.lt.s32.totalorder %s209, 31
      %s211 = scalar_select %p210, %s209, 31
      %s212 = smul.addr %s211, 8
      %s213 = scalar_lea.vmem %s4, %s212
      %s214 = smul.u32 8, %s16
      %v215 = vld [vmem:[%s201] sm:$0xff]
      %v216 = vld [vmem:[%s201 + $0x8] sm:$0xff]
      %v217 = vld [vmem:[%s201 + $0x10] sm:$0xff]
      %v218 = vld [vmem:[%s201 + $0x18] sm:$0xff]
      %v219 = vld [vmem:[%s201 + $0x20] sm:$0xff]
      %v220 = vld [vmem:[%s201 + $0x28] sm:$0xff]
      %v221 = vld [vmem:[%s201 + $0x30] sm:$0xff]
      %v222 = vld [vmem:[%s201 + $0x38] sm:$0xff]
      %v223 = vld [vmem:[%s1] sm:$0xff]
      %v224 = vld [vmem:[%s1 + $0x8] sm:$0xff]
      %v225 = vld [vmem:[%s1 + $0x10] sm:$0xff]
      %v226 = vld [vmem:[%s1 + $0x18] sm:$0xff]
      %vm227 = vcmask 261120
      %v229 = vsel %vm227, %v215, 0
      %v232 = vsel %vm227, %v216, 0
      %v235 = vsel %vm227, %v217, 0
      %v238 = vsel %vm227, %v218, 0
      %v241 = vsel %vm227, %v219, 0
      %v244 = vsel %vm227, %v220, 0
      %v247 = vsel %vm227, %v221, 0
      %v250 = vsel %vm227, %v222, 0
      %252 = vmatprep.subr.mxu0 0.0
      %253 = vmatpush1.msra.mxu0 %v223
      %254 = vmatprep.subr.mxu0 0.0
      %255 = vmatpush1.msra.mxu0 %v224
      %256 = vmatprep.subr.mxu0 0.0
      %257 = vmatpush1.msra.mxu0 %v225
      %258 = vmatprep.subr.mxu0 0.0
      %259 = vmatpush1.msra.mxu0 %v226
      %260 = vmatprep.subr.mxu0 0.0
      %261 = vmatpush1.msra.mxu0 0.0
      %262 = vmatprep.subr.mxu0 0.0
      %263 = vmatpush1.msra.mxu0 0.0
      %264 = vmatprep.subr.mxu0 0.0
      %265 = vmatpush1.msra.mxu0 0.0
      %266 = vmatprep.subr.mxu0 0.0
      %267 = vmatpush1.msra.mxu0 0.0
      %268 = vmatprep.subr.mxu0 0.0
      %269 = vmatpush1.msra.mxu0 0.0
      %270 = vmatprep.subr.mxu0 0.0
      %271 = vmatpush1.msra.mxu0 0.0
      %272 = vmatprep.subr.mxu0 0.0
      %273 = vmatpush1.msra.mxu0 0.0
      %274 = vmatprep.subr.mxu0 0.0
      %275 = vmatpush1.msra.mxu0 0.0
      %276 = vmatprep.subr.mxu0 0.0
      %277 = vmatpush1.msra.mxu0 0.0
      %278 = vmatprep.subr.mxu0 0.0
      %279 = vmatpush1.msra.mxu0 0.0
      %280 = vmatprep.subr.mxu0 0.0
      %281 = vmatpush1.msra.mxu0 0.0
      %282 = vmatprep.subr.mxu0 0.0
      %283 = vmatpush1.msra.mxu0 0.0
      %284 = vmatprep.subr.mxu0 0.0
      %285 = vmatpush1.msra.mxu0 0.0
      %286 = vmatprep.subr.mxu0 0.0
      %287 = vmatpush1.msra.mxu0 0.0
      %288 = vmatprep.subr.mxu0 0.0
      %289 = vmatpush1.msra.mxu0 0.0
      %290 = vmatprep.subr.mxu0 0.0
      %291 = vmatpush1.msra.mxu0 0.0
      %292 = vmatprep.subr.mxu0 0.0
      %293 = vmatpush1.msra.mxu0 0.0
      %294 = vmatprep.subr.mxu0 0.0
      %295 = vmatpush1.msra.mxu0 0.0
      %296 = vmatprep.subr.mxu0 0.0
      %297 = vmatpush1.msra.mxu0 0.0
      %298 = vmatprep.subr.mxu0 0.0
      %299 = vmatpush1.msra.mxu0 0.0
      %300 = vmatprep.subr.mxu0 0.0
      %301 = vmatpush1.msra.mxu0 0.0
      %302 = vmatprep.subr.mxu0 0.0
      %303 = vmatpush1.msra.mxu0 0.0
      %304 = vmatprep.subr.mxu0 0.0
      %305 = vmatpush1.msra.mxu0 0.0
      %306 = vmatprep.subr.mxu0 0.0
      %307 = vmatpush1.msra.mxu0 0.0
      %308 = vmatprep.subr.mxu0 0.0
      %309 = vmatpush1.msra.mxu0 0.0
      %310 = vmatprep.subr.mxu0 0.0
      %311 = vmatpush1.msra.mxu0 0.0
      %312 = vmatprep.subr.mxu0 0.0
      %313 = vmatpush1.msra.mxu0 0.0
      %314 = vmatprep.subr.mxu0 0.0
      %315 = vmatpush1.msra.mxu0 0.0
      %316 = vmatprep.mubr.f32.mxu0 0.0
      %317 = vmatmul.mubr.f32.gmra.mrb[0].mxu0 %v229
      %v318 = vpop.f32.mrb[0].mxu0
      %v319 = vadd.f32 0.0, %v318
      %v320 = vpop.f32.mrb[0].mxu0
      %321 = vmatprep.mubr.f32.mxu0 0.0
      %322 = vmatmul.mubr.f32.gmra.mrb[0].mxu0 %v232
      %v323 = vpop.f32.mrb[0].mxu0
      %v324 = vadd.f32 0.0, %v323
      %v325 = vpop.f32.mrb[0].mxu0
      %326 = vmatprep.mubr.f32.mxu0 0.0
      %327 = vmatmul.mubr.f32.gmra.mrb[0].mxu0 %v235
      %v328 = vpop.f32.mrb[0].mxu0
      %v329 = vadd.f32 0.0, %v328
      %v330 = vpop.f32.mrb[0].mxu0
      %331 = vmatprep.mubr.f32.mxu0 0.0
      %332 = vmatmul.mubr.f32.gmra.mrb[0].mxu0 %v238
      %v333 = vpop.f32.mrb[0].mxu0
      %v334 = vadd.f32 0.0, %v333
      %v335 = vpop.f32.mrb[0].mxu0
      %336 = vmatprep.mubr.f32.mxu0 0.0
      %337 = vmatmul.mubr.f32.gmra.mrb[0].mxu0 %v241
      %v338 = vpop.f32.mrb[0].mxu0
      %v339 = vadd.f32 0.0, %v338
      %v340 = vpop.f32.mrb[0].mxu0
      %341 = vmatprep.mubr.f32.mxu0 0.0
      %342 = vmatmul.mubr.f32.gmra.mrb[0].mxu0 %v244
      %v343 = vpop.f32.mrb[0].mxu0
      %v344 = vadd.f32 0.0, %v343
      %v345 = vpop.f32.mrb[0].mxu0
      %346 = vmatprep.mubr.f32.mxu0 0.0
      %347 = vmatmul.mubr.f32.gmra.mrb[0].mxu0 %v247
      %v348 = vpop.f32.mrb[0].mxu0
      %v349 = vadd.f32 0.0, %v348
      %v350 = vpop.f32.mrb[0].mxu0
      %351 = vmatprep.mubr.f32.mxu0 0.0
      %352 = vmatmul.mubr.f32.gmra.mrb[0].mxu0 %v250
      %v353 = vpop.f32.mrb[0].mxu0
      %v354 = vadd.f32 0.0, %v353
      %v355 = vpop.f32.mrb[0].mxu0
      %356 = vdwg.mxu0
      %vm357 = vcmask 523264
      %358 = vst.msk [vmem:[%s207] sm:$0xff] %vm357, %v319
      %359 = vst.msk [vmem:[%s207 + $0x8] sm:$0xff] %vm357, %v324
      %360 = vst.msk [vmem:[%s207 + $0x10] sm:$0xff] %vm357, %v329
      %361 = vst.msk [vmem:[%s207 + $0x18] sm:$0xff] %vm357, %v334
      %362 = vst.msk [vmem:[%s207 + $0x20] sm:$0xff] %vm357, %v339
      %363 = vst.msk [vmem:[%s207 + $0x28] sm:$0xff] %vm357, %v344
      %364 = vst.msk [vmem:[%s207 + $0x30] sm:$0xff] %vm357, %v349
      %365 = vst.msk [vmem:[%s207 + $0x38] sm:$0xff] %vm357, %v354
      %v366 = vld [vmem:[%s2] sm:$0xff]
      %v367 = vld [vmem:[%s2 + $0x8] sm:$0xff]
      %v368 = vld [vmem:[%s2 + $0x10] sm:$0xff]
      %v369 = vld [vmem:[%s2 + $0x18] sm:$0xff]
      %v370 = vld [vmem:[%s2 + $0x20] sm:$0xff]
      %v371 = vld [vmem:[%s2 + $0x28] sm:$0xff]
      %v372 = vld [vmem:[%s2 + $0x30] sm:$0xff]
      %v373 = vld [vmem:[%s2 + $0x38] sm:$0xff]
      %v375 = vsel %vm357, %v319, 0
      %v378 = vsel %vm357, %v324, 0
      %v381 = vsel %vm357, %v329, 0
      %v384 = vsel %vm357, %v334, 0
      %v387 = vsel %vm357, %v339, 0
      %v390 = vsel %vm357, %v344, 0
      %v393 = vsel %vm357, %v349, 0
      %v396 = vsel %vm357, %v354, 0
      %398 = vmatprep.subr.mxu0 0.0
      %399 = vmatpush1.msra.mxu0 %v366
      %400 = vmatprep.subr.mxu0 0.0
      %401 = vmatpush1.msra.mxu0 %v367
      %402 = vmatprep.subr.mxu0 0.0
      %403 = vmatpush1.msra.mxu0 %v368
      %404 = vmatprep.subr.mxu0 0.0
      %405 = vmatpush1.msra.mxu0 %v369
      %406 = vmatprep.subr.mxu0 0.0
      %407 = vmatpush1.msra.mxu0 %v370
      %408 = vmatprep.subr.mxu0 0.0
      %409 = vmatpush1.msra.mxu0 %v371
      %410 = vmatprep.subr.mxu0 0.0
      %411 = vmatpush1.msra.mxu0 %v372
      %412 = vmatprep.subr.mxu0 0.0
      %413 = vmatpush1.msra.mxu0 %v373
      %414 = vmatprep.subr.mxu0 0.0
      %415 = vmatpush1.msra.mxu0 0.0
      %416 = vmatprep.subr.mxu0 0.0
      %417 = vmatpush1.msra.mxu0 0.0
      %418 = vmatprep.subr.mxu0 0.0
      %419 = vmatpush1.msra.mxu0 0.0
      %420 = vmatprep.subr.mxu0 0.0
      %421 = vmatpush1.msra.mxu0 0.0
      %422 = vmatprep.subr.mxu0 0.0
      %423 = vmatpush1.msra.mxu0 0.0
      %424 = vmatprep.subr.mxu0 0.0
      %425 = vmatpush1.msra.mxu0 0.0
      %426 = vmatprep.subr.mxu0 0.0
      %427 = vmatpush1.msra.mxu0 0.0
      %428 = vmatprep.subr.mxu0 0.0
      %429 = vmatpush1.msra.mxu0 0.0
      %430 = vmatprep.subr.mxu0 0.0
      %431 = vmatpush1.msra.mxu0 0.0
      %432 = vmatprep.subr.mxu0 0.0
      %433 = vmatpush1.msra.mxu0 0.0
      %434 = vmatprep.subr.mxu0 0.0
      %435 = vmatpush1.msra.mxu0 0.0
      %436 = vmatprep.subr.mxu0 0.0
      %437 = vmatpush1.msra.mxu0 0.0
      %438 = vmatprep.subr.mxu0 0.0
      %439 = vmatpush1.msra.mxu0 0.0
      %440 = vmatprep.subr.mxu0 0.0
      %441 = vmatpush1.msra.mxu0 0.0
      %442 = vmatprep.subr.mxu0 0.0
      %443 = vmatpush1.msra.mxu0 0.0
      %444 = vmatprep.subr.mxu0 0.0
      %445 = vmatpush1.msra.mxu0 0.0
      %446 = vmatprep.subr.mxu0 0.0
      %447 = vmatpush1.msra.mxu0 0.0
      %448 = vmatprep.subr.mxu0 0.0
      %449 = vmatpush1.msra.mxu0 0.0
      %450 = vmatprep.subr.mxu0 0.0
      %451 = vmatpush1.msra.mxu0 0.0
      %452 = vmatprep.subr.mxu0 0.0
      %453 = vmatpush1.msra.mxu0 0.0
      %454 = vmatprep.subr.mxu0 0.0
      %455 = vmatpush1.msra.mxu0 0.0
      %456 = vmatprep.subr.mxu0 0.0
      %457 = vmatpush1.msra.mxu0 0.0
      %458 = vmatprep.subr.mxu0 0.0
      %459 = vmatpush1.msra.mxu0 0.0
      %460 = vmatprep.subr.mxu0 0.0
      %461 = vmatpush1.msra.mxu0 0.0
      %462 = vmatprep.mubr.f32.mxu0 0.0
      %463 = vmatmul.mubr.f32.gmra.mrb[0].mxu0 %v375
      %v464 = vpop.f32.mrb[0].mxu0
      %v465 = vadd.f32 0.0, %v464
      %v466 = vpop.f32.mrb[0].mxu0
      %467 = vmatprep.mubr.f32.mxu0 0.0
      %468 = vmatmul.mubr.f32.gmra.mrb[0].mxu0 %v378
      %v469 = vpop.f32.mrb[0].mxu0
      %v470 = vadd.f32 0.0, %v469
      %v471 = vpop.f32.mrb[0].mxu0
      %472 = vmatprep.mubr.f32.mxu0 0.0
      %473 = vmatmul.mubr.f32.gmra.mrb[0].mxu0 %v381
      %v474 = vpop.f32.mrb[0].mxu0
      %v475 = vadd.f32 0.0, %v474
      %v476 = vpop.f32.mrb[0].mxu0
      %477 = vmatprep.mubr.f32.mxu0 0.0
      %478 = vmatmul.mubr.f32.gmra.mrb[0].mxu0 %v384
      %v479 = vpop.f32.mrb[0].mxu0
      %v480 = vadd.f32 0.0, %v479
      %v481 = vpop.f32.mrb[0].mxu0
      %482 = vmatprep.mubr.f32.mxu0 0.0
      %483 = vmatmul.mubr.f32.gmra.mrb[0].mxu0 %v387
      %v484 = vpop.f32.mrb[0].mxu0
      %v485 = vadd.f32 0.0, %v484
      %v486 = vpop.f32.mrb[0].mxu0
      %487 = vmatprep.mubr.f32.mxu0 0.0
      %488 = vmatmul.mubr.f32.gmra.mrb[0].mxu0 %v390
      %v489 = vpop.f32.mrb[0].mxu0
      %v490 = vadd.f32 0.0, %v489
      %v491 = vpop.f32.mrb[0].mxu0
      %492 = vmatprep.mubr.f32.mxu0 0.0
      %493 = vmatmul.mubr.f32.gmra.mrb[0].mxu0 %v393
      %v494 = vpop.f32.mrb[0].mxu0
      %v495 = vadd.f32 0.0, %v494
      %v496 = vpop.f32.mrb[0].mxu0
      %497 = vmatprep.mubr.f32.mxu0 0.0
      %498 = vmatmul.mubr.f32.gmra.mrb[0].mxu0 %v396
      %v499 = vpop.f32.mrb[0].mxu0
      %v500 = vadd.f32 0.0, %v499
      %v501 = vpop.f32.mrb[0].mxu0
      %502 = vdwg.mxu0
      %vm503 = vcmask 64512
      %504 = vst.msk [vmem:[%s213] sm:$0xff] %vm503, %v465
      %505 = vst.msk [vmem:[%s213 + $0x8] sm:$0xff] %vm503, %v470
      %506 = vst.msk [vmem:[%s213 + $0x10] sm:$0xff] %vm503, %v475
      %507 = vst.msk [vmem:[%s213 + $0x18] sm:$0xff] %vm503, %v480
      %508 = vst.msk [vmem:[%s213 + $0x20] sm:$0xff] %vm503, %v485
      %509 = vst.msk [vmem:[%s213 + $0x28] sm:$0xff] %vm503, %v490
      %510 = vst.msk [vmem:[%s213 + $0x30] sm:$0xff] %vm503, %v495
      %511 = vst.msk [vmem:[%s213 + $0x38] sm:$0xff] %vm503, %v500
      %s512 = smul.u32 8, %s16
      %p513 = scmp.lt.s32.totalorder %s512, 31
      %s514 = scalar_select %p513, %s512, 31
      %s515 = smul.addr %s514, 8
      %s516 = scalar_lea.vmem %s3, %s515
      %s517 = smul.u32 8, %s16
      %p518 = scmp.lt.s32.totalorder %s517, 31
      %s519 = scalar_select %p518, %s517, 31
      %s520 = smul.addr %s519, 8
      %s521 = scalar_lea.vmem %s4, %s520
      // Predicated region
      $region33: #{tpu_custom_call.1} parent=31 // pred_check
        %p522 = pneg %p102
      $region34: #{tpu_custom_call.1} parent=31 // pred_check_branch
        %524 = sbr.rel (%p522) target = $region36
      $region35: #{tpu_custom_call.1} parent=31 // pred_region
        %s525 = smul.u32 8, %s16
      $region36: #{tpu_custom_call.1} parent=31 // pred_fallthru
        _
      // Predicated region
      $region37: #{tpu_custom_call.1} parent=31 // pred_check
        %p526 = pneg %p128
      $region38: #{tpu_custom_call.1} parent=31 // pred_check_branch
        %528 = sbr.rel (%p526) target = $region40
      $region39: #{tpu_custom_call.1} parent=31 // pred_region
        %s529 = smul.u32 8, %s16
      $region40: #{tpu_custom_call.1} parent=31 // pred_fallthru
        _
    $region32: #{tpu_custom_call.1} parent=5 // pred_fallthru
      _
    %p530 = scmp.le.s32.totalorder 2, %s11
    // Predicated region
    $region41: #{tpu_custom_call.1} parent=5 // pred_check
      %p531 = pneg %p530
    $region42: #{tpu_custom_call.1} parent=5 // pred_check_branch
      %533 = sbr.rel (%p531) target = $region44
    $region43: #{tpu_custom_call.1} parent=5 // pred_region
      %s534 = ssub.s32 %s11, 2
      // Predicated region
      $region45: #{tpu_custom_call.1} parent=43 // pred_check
        %p535 = pneg %p108
      $region46: #{tpu_custom_call.1} parent=43 // pred_check_branch
        %537 = sbr.rel (%p535) target = $region48
      $region47: #{tpu_custom_call.1} parent=43 // pred_region
        %s538 = smul.u32 8, %s17
        %p539 = scmp.lt.s32.totalorder %s538, 31
        %s540 = scalar_select %p539, %s538, 31
        %s541 = smul.addr %s540, 8
        %s542 = scalar_lea.vmem %s3, %s541
      $region48: #{tpu_custom_call.1} parent=43 // pred_fallthru
        _
      // Predicated region
      $region49: #{tpu_custom_call.1} parent=43 // pred_check
        %p543 = pneg %p134
      $region50: #{tpu_custom_call.1} parent=43 // pred_check_branch
        %545 = sbr.rel (%p543) target = $region52
      $region51: #{tpu_custom_call.1} parent=43 // pred_region
        %s546 = smul.u32 8, %s17
        %p547 = scmp.lt.s32.totalorder %s546, 31
        %s548 = scalar_select %p547, %s546, 31
        %s549 = smul.addr %s548, 8
        %s550 = scalar_lea.vmem %s4, %s549
      $region52: #{tpu_custom_call.1} parent=43 // pred_fallthru
        _
    $region44: #{tpu_custom_call.1} parent=5 // pred_fallthru
      _
  $region6: #{tpu_custom_call.1} parent=0 // loop_footer
    %s15 = sadd.s32 1, %s11
  $region7: #{tpu_custom_call.1} parent=0 // loop_footer_branch
    %10 = sbr.rel target = $region3
  $region8: #{tpu_custom_call.1} parent=0 // loop_exit
    _

</llo_original>
